<compile_context>
chip_gen: v7x
topology: tpu7x:2x2x1
jax: 0.10.0
libtpu: 0.0.40
codegen_flags: <defaults>
</compile_context>

<pallas_src>
import functools
import math

import jax
import jax.numpy as jnp
from jax.experimental import pallas as pl
from jax.experimental.pallas import tpu as pltpu


def _cdiv(a, b):
    return -(-a // b)


def _round_up(a, b):
    return _cdiv(a, b) * b


# Minimum sublane multiple for the second-to-last block dim, by itemsize.
_SUBLANE = {1: 32, 2: 16, 4: 8, 8: 8}


def _tanh_head_kernel(x_ref, o_ref, *, head_cols, col_blk, tanh_all):
    """One (row_blk, col_blk) tile of the flattened (N, C*S) tensor."""
    x = x_ref[...]
    xf = x.astype(jnp.float32)
    # TODO(synk): v6e/v7x could run tanh directly in bf16 (bf16 EUP); keeping
    # f32 compute for accuracy parity with the PyTorch reference and for v5e.
    t = jnp.tanh(xf)
    if tanh_all:
        o_ref[...] = t.astype(o_ref.dtype)
    else:
        start = pl.program_id(1) * col_blk
        col = start + jax.lax.broadcasted_iota(jnp.int32, x.shape, 1)
        # Single unmasked full-tile store; tanh-on-all is free (EUP slack).
        o_ref[...] = jnp.where(col < head_cols, t, xf).astype(o_ref.dtype)


def _pick_blocks(n_rows, total, cover, itemsize,
                 target_bytes=4 * 1024 * 1024, min_steps=16):
    """Choose (row_blk, col_blk) for the flattened (n_rows, total) layout."""
    sub = _SUBLANE.get(itemsize, 8)
    row_blk = sub if (n_rows % sub == 0) else n_rows        # full extent OK
    padded_rows = _round_up(row_blk, sub)                   # VMEM footprint

    if total < 128:
        # Tiny tensor: single full-extent column block (lane-sparse but cheap).
        return row_blk, total

    cap = max(128, (target_bytes // (padded_rows * itemsize)) // 128 * 128)
    lane_total = max((total // 128) * 128, 128)
    col_blk = min(cap, _round_up(cover, 128), lane_total)

    # Guarantee enough grid steps for pipelining / 2-TensorCore sharding.
    row_blocks = _cdiv(n_rows, row_blk)
    if row_blocks * _cdiv(cover, col_blk) < min_steps:
        want_cols = _cdiv(min_steps, row_blocks)
        col_blk = min(col_blk, max(128, (cover // want_cols) // 128 * 128))
    return row_blk, col_blk


def tanh_first_n_channels(x, channels_to_tanh):
    """Apply tanh to x[:, :channels_to_tanh, ...]; other channels untouched."""
    if x.ndim < 2:
        raise ValueError("expected input of shape (N, C, ...)")
    ct = int(channels_to_tanh)
    n, c = x.shape[0], x.shape[1]
    if ct <= 0 or any(d == 0 for d in x.shape):
        return x
    ct = min(ct, c)

    spatial = math.prod(x.shape[2:]) if x.ndim > 2 else 1
    total = c * spatial                 # flattened row length
    head = ct * spatial                 # tanh region per row
    itemsize = x.dtype.itemsize

    x2 = x.reshape(n, total)            # free row-major reshape, lane-dense

    tanh_all = head >= total
    cover = total if tanh_all else min(_round_up(head, 128), total)

    row_blk, col_blk = _pick_blocks(n, total, cover, itemsize)
    row_blocks = _cdiv(n, row_blk)
    col_blocks = _cdiv(cover, col_blk)
    covered = min(col_blocks * col_blk, total)

    spec = pl.BlockSpec((row_blk, col_blk), lambda i, j: (i, j))
    kernel = functools.partial(
        _tanh_head_kernel, head_cols=head, col_blk=col_blk, tanh_all=tanh_all)

    cost = pl.CostEstimate(
        flops=n * covered,
        transcendentals=n * covered,
        bytes_accessed=2 * n * covered * itemsize,
    )

    call_kwargs = {}
    if covered < total:
        # The grid deliberately leaves the pass-through channels untouched in
        # HBM; aliasing the output onto the input keeps them defined (XLA
        # copies the full input first if the caller cannot donate it).
        call_kwargs["input_output_aliases"] = {0: 0}

    y2 = pl.pallas_call(
        kernel,
        out_shape=jax.ShapeDtypeStruct(x2.shape, x2.dtype),
        grid=(row_blocks, col_blocks),
        in_specs=[spec],
        out_specs=spec,
        compiler_params=pltpu.CompilerParams(
            dimension_semantics=("parallel", "parallel"),
            vmem_limit_bytes=40 * 1024 * 1024),
        cost_estimate=cost,
        **call_kwargs,
    )(x2)
    return y2.reshape(x.shape)


class TanhFirstNChansOnlyBlock:
    """JAX/Pallas port of verydeepvae TanhFirstNChansOnlyBlock."""

    def __init__(self, **kwargs):
        self.kwargs = kwargs
        self.channels_to_tanh = kwargs["channels_to_tanh"]
        # TODO(synk): torch.cuda.amp.autocast(half_precision) has no direct
        # Pallas equivalent; tanh is computed in f32 in-kernel and cast back
        # to the input dtype (matching the in-place write-back semantics).

    def __call__(self, data_dictionary):
        data_dictionary["data"] = tanh_first_n_channels(
            data_dictionary["data"], self.channels_to_tanh)
        return data_dictionary


if __name__ == "__main__":
    key = jax.random.PRNGKey(0)
    k1, k2, k3 = jax.random.split(key, 3)

    # Main case: NCHW, tanh on the first 2 of 4 channels (head-only + alias).
    x = jax.random.normal(k1, (2, 4, 16, 16), dtype=jnp.float32)
    block = TanhFirstNChansOnlyBlock(channels_to_tanh=2, half_precision=False)
    out = jax.block_until_ready(block({"data": x})["data"])
    ref = x.at[:, 0:2, ...].set(jnp.tanh(x[:, 0:2, ...]))
    assert out.shape == x.shape and out.dtype == x.dtype
    assert jnp.allclose(out, ref, atol=1e-6), "mismatch vs reference (ct=2)"

    # All-channel case (exercises the tanh_all branch, no aliasing).
    block_all = TanhFirstNChansOnlyBlock(channels_to_tanh=4, half_precision=False)
    out_all = jax.block_until_ready(block_all({"data": x})["data"])
    assert jnp.allclose(out_all, jnp.tanh(x), atol=1e-6), "mismatch (ct=C)"

    # Odd/small spatial dims: exercises the in-tile column mask + aliasing.
    x_odd = jax.random.normal(k2, (2, 5, 7, 9), dtype=jnp.float32)
    out_odd = jax.block_until_ready(tanh_first_n_channels(x_odd, 2))
    ref_odd = x_odd.at[:, 0:2, ...].set(jnp.tanh(x_odd[:, 0:2, ...]))
    assert jnp.allclose(out_odd, ref_odd, atol=1e-6), "mismatch (odd spatial)"

    # bf16 path (f32 tanh, cast back to bf16).
    x_bf = jax.random.normal(k3, (2, 4, 16, 16), dtype=jnp.bfloat16)
    out_bf = jax.block_until_ready(tanh_first_n_channels(x_bf, 3))
    ref_bf = x_bf.at[:, 0:3, ...].set(
        jnp.tanh(x_bf[:, 0:3, ...].astype(jnp.float32)).astype(jnp.bfloat16))
    assert out_bf.dtype == jnp.bfloat16
    assert jnp.allclose(out_bf.astype(jnp.float32), ref_bf.astype(jnp.float32),
                        atol=2e-2), "mismatch (bf16)"

    print("KERNEL_OK")
</pallas_src>

<mosaic_0001>
module attributes {stable_mosaic.version = 11 : i64} {
  func.func @_tanh_head_kernel(%arg0: i32, %arg1: i32, %arg2: memref<2x128xf32, #tpu.memory_space<vmem>>, %arg3: memref<2x128xf32, #tpu.memory_space<vmem>>) attributes {dimension_semantics = [#tpu.dimension_semantics<parallel>, #tpu.dimension_semantics<parallel>], iteration_bounds = array<i64: 1, 4>, scalar_prefetch = 0 : i64, scratch_operands = 0 : i64, tpu.core_type = #tpu.core_type<tc>, window_params = [{transform_indices = @transform_0, window_bounds = array<i64: 2, 128>}, {transform_indices = @transform_1, window_bounds = array<i64: 2, 128>}]} {
    %c0 = arith.constant 0 : index
    %c0_0 = arith.constant 0 : index
    %0 = vector.load %arg2[%c0, %c0_0] : memref<2x128xf32, #tpu.memory_space<vmem>>, vector<2x128xf32>
    %1 = math.tanh %0 : vector<2x128xf32>
    %c128_i32 = arith.constant 128 : i32
    %2 = arith.muli %arg1, %c128_i32 : i32
    %3 = tpu.iota {dimensions = array<i32: 1>} : vector<2x128xi32>
    %4 = vector.broadcast %2 : i32 to vector<2x128xi32>
    %5 = arith.addi %4, %3 : vector<2x128xi32>
    %c512_i32 = arith.constant 512 : i32
    %6 = vector.broadcast %c512_i32 : i32 to vector<2x128xi32>
    %7 = arith.cmpi slt, %5, %6 : vector<2x128xi32>
    %8 = arith.select %7, %1, %0 : vector<2x128xi1>, vector<2x128xf32>
    %c0_1 = arith.constant 0 : index
    %c0_2 = arith.constant 0 : index
    %9 = vector.load %arg3[%c0_1, %c0_2] : memref<2x128xf32, #tpu.memory_space<vmem>>, vector<2x128xf32>
    tpu.vector_store %arg3[%c0_1, %c0_2], %8 {strides = array<i32>} : memref<2x128xf32, #tpu.memory_space<vmem>>, vector<2x128xf32>,
    return
  }
  func.func @transform_0(%arg0: i32, %arg1: i32) -> (i32, i32) {
    %c0_i32 = arith.constant 0 : i32
    return %arg0, %arg1 : i32, i32
  }
  func.func @transform_1(%arg0: i32, %arg1: i32) -> (i32, i32) {
    %c0_i32 = arith.constant 0 : i32
    return %arg0, %arg1 : i32, i32
  }
}

</mosaic_0001>

<llo_original>
// kernel: tpu_custom_call.1
$region0: #{tpu_custom_call.1}
  #allocation0 [shape = 'u32[]', space=smem, size = 0x4, offset = 0x4, fixed_abs, tag = 'smem constant byte address 0x4 - core index']
  #allocation1 [shape = 'u32[144,128]{1,0:T(1,128)}', space=vmem, size = 0x12000, scoped, tag = 'internal scratch']
  %s0 = inlined_call_operand.hbm [shape: f32[2,1024], index: 0, kind: input, shape index: {}, may-alias: {0,1}]
  %s1 = inlined_call_operand.hbm [shape: f32[2,1024], index: 1, kind: output, shape index: {}, may-alias: {0,1}]
  %s2 = sld [smem:[#allocation0]]
  $region41: #{tpu_custom_call.1} parent=0
    _
  %s4 = ssub.s32 1, %s2
  %s5 = scalar_select 0, %s4, %s2
  $region1: #{tpu_custom_call.1} parent=0
    #allocation2 [shape = 'u8[2048]{0}', space=vmem, size = 0x800, scoped, tag = 'input window, operand 0']
    #allocation3 [shape = 's32[2]{0}', space=sflag, size = 0x8, scoped, tag = 'scoped memory for tpu_custom_call.1']
    #allocation4 [shape = 's32[2]{0}', space=sflag, size = 0x8, scoped, tag = 'scoped memory for tpu_custom_call.1']
    #allocation5 [shape = 'u8[2048]{0}', space=vmem, size = 0x800, scoped, tag = 'output window, operand 0']
    %6 = vsyncpa [#allocation3], 0
    %s7 = scalar_lea.sflag [#allocation3], 1
    %8 = vsyncpa %s7, 0
    %9 = vsyncpa [#allocation4], 0
    %s10 = scalar_lea.sflag [#allocation4], 1
    %11 = vsyncpa %s10, 0
    loop: start=0, step=1, limit=6
    $region2: #{tpu_custom_call.1} parent=1 // loop_pre_header
      _
    $region3: #{tpu_custom_call.1} parent=1 // loop_header
      %s13 = sphi 0, %s17
      %p14 = scmp.ge.s32.totalorder %s13, 6
      %s20 = sphi 0, %s32
      %s21 = sphi 0, %s28
      %s22 = sphi 0, %s20
      %s23 = sphi 0, %s21
      %s24 = sphi 0, %s22
      %s25 = sphi 0, %s23
      %s37 = sphi 0, %s39
      %s40 = sphi 0, %s37
      %s41 = sphi 0, %s40
      %s57 = sphi 0, %s41
      %s65 = sphi 0, %s67
      %s68 = sphi 0, %s65
      %s69 = sphi 0, %s68
      %s85 = sphi 0, %s69
    $region4: #{tpu_custom_call.1} parent=1 // loop_header_branch
      %16 = sbr.rel (%p14) target = $region8
    $region5: #{tpu_custom_call.1} parent=1 // loop_body
      %s18 = ssub.s32 %s13, 1
      %s19 = ssub.s32 %s13, 2
      %s26 = sadd.s32 1, %s21
      %p27 = scmp.ge.s32.totalorder %s26, 4
      %s28 = scalar_select %p27, 0, %s26
      %s29 = sadd.s32 1, %s20
      %s30 = scalar_select %p27, %s29, %s20
      %p31 = scmp.ge.s32.totalorder %s30, 1
      %s32 = scalar_select %p31, 0, %s30
      %s33 = ssub.s32 %s20, %s32
      %s34 = ssub.s32 %s21, %s28
      %s35 = sor.u32 %s33, %s34
      %p36 = scmp.eq.s32.totalorder %s35, 0
      %s38 = sadd.s32 %s37, 1
      %s39 = scalar_select %p36, %s37, %s38
      %p42 = pneg %p36
      %p43 = scmp.eq.s32.totalorder %s13, 3
      %p44 = por %p42, %p43
      %p45 = scmp.ne.s32.totalorder %s37, %s40
      %p46 = scmp.eq.s32.totalorder %s13, 0
      %p47 = por %p45, %p46
      %p48 = scmp.ne.s32.totalorder %s37, %s40
      %p49 = scmp.eq.s32.totalorder %s18, 3
      %p50 = por %p48, %p49
      %p51 = scmp.ne.s32.totalorder %s40, %s41
      %p52 = scmp.eq.s32.totalorder %s18, 0
      %p53 = por %p51, %p52
      %p54 = scmp.ne.s32.totalorder %s40, %s41
      %p55 = scmp.eq.s32.totalorder %s19, 3
      %p56 = por %p54, %p55
      %p58 = scmp.ne.s32.totalorder %s41, %s57
      %p59 = scmp.eq.s32.totalorder %s19, 0
      %p60 = por %p58, %p59
      %s61 = ssub.s32 %s20, %s32
      %s62 = ssub.s32 %s21, %s28
      %s63 = sor.u32 %s61, %s62
      %p64 = scmp.eq.s32.totalorder %s63, 0
      %s66 = sadd.s32 %s65, 1
      %s67 = scalar_select %p64, %s65, %s66
      %p70 = pneg %p64
      %p71 = scmp.eq.s32.totalorder %s13, 3
      %p72 = por %p70, %p71
      %p73 = scmp.ne.s32.totalorder %s65, %s68
      %p74 = scmp.eq.s32.totalorder %s13, 0
      %p75 = por %p73, %p74
      %p76 = scmp.ne.s32.totalorder %s65, %s68
      %p77 = scmp.eq.s32.totalorder %s18, 3
      %p78 = por %p76, %p77
      %p79 = scmp.ne.s32.totalorder %s68, %s69
      %p80 = scmp.eq.s32.totalorder %s18, 0
      %p81 = por %p79, %p80
      %p82 = scmp.ne.s32.totalorder %s68, %s69
      %p83 = scmp.eq.s32.totalorder %s19, 3
      %p84 = por %p82, %p83
      %p86 = scmp.ne.s32.totalorder %s69, %s85
      %p87 = scmp.eq.s32.totalorder %s19, 0
      %p88 = por %p86, %p87
      %p89 = scmp.le.s32.totalorder 1, %s13
      %p90 = scmp.lt.s32.totalorder %s13, 5
      %p91 = pnand %p89, %p90
      %p92 = pneg %p91
      // Predicated region
      $region9: #{tpu_custom_call.1} parent=5 // pred_check
        _
      $region10: #{tpu_custom_call.1} parent=5 // pred_check_branch
        %94 = sbr.rel (%p91) target = $region12
      $region11: #{tpu_custom_call.1} parent=5 // pred_region
        %s95 = ssub.s32 %s13, 1
      $region12: #{tpu_custom_call.1} parent=5 // pred_fallthru
        _
      %p96 = scmp.lt.s32.totalorder %s13, 4
      // Predicated region
      $region13: #{tpu_custom_call.1} parent=5 // pred_check
        %p97 = pneg %p96
      $region14: #{tpu_custom_call.1} parent=5 // pred_check_branch
        %99 = sbr.rel (%p97) target = $region16
      $region15: #{tpu_custom_call.1} parent=5 // pred_region
        // Predicated region
        $region17: #{tpu_custom_call.1} parent=15 // pred_check
          %p100 = pneg %p47
        $region18: #{tpu_custom_call.1} parent=15 // pred_check_branch
          %102 = sbr.rel (%p100) target = $region20
        $region19: #{tpu_custom_call.1} parent=15 // pred_region
          %s103 = sand.u32 %s37, 1
          %s104 = scalar_lea.sflag [#allocation3], %s103
          %s105 = sand.u32 %s37, 1
          %s106 = smul.addr %s105, 2
          %s107 = scalar_lea.vmem [#allocation2], %s106
          %s109 = ssub.s32 32, 32
          %110 = vsyncadd %s104, %s109
          %s111 = smul.addr %s20, 8
          %s112 = sadd.s32 %s21, %s111
          %s113 = smul.addr %s112, 32
          %s114 = scalar_lea.hbm %s0, %s113
          %s116 = sshll.u32 %s107, 4
          %s117 = int_to_ptr.vmem [resolvable:$true] %s116
          %119 = dma.hbm_to_vmem [thread:$0]  %s114, 32, %s117, %s104
        $region20: #{tpu_custom_call.1} parent=15 // pred_fallthru
          _
      $region16: #{tpu_custom_call.1} parent=5 // pred_fallthru
        _
      %p120 = scmp.le.s32.totalorder 1, %s13
      %p121 = scmp.lt.s32.totalorder %s13, 5
      %p122 = pnand %p120, %p121
      %p123 = pneg %p122
      // Predicated region
      $region21: #{tpu_custom_call.1} parent=5 // pred_check
        _
      $region22: #{tpu_custom_call.1} parent=5 // pred_check_branch
        %125 = sbr.rel (%p122) target = $region24
      $region23: #{tpu_custom_call.1} parent=5 // pred_region
        %s126 = ssub.s32 %s13, 1
        %s127 = sand.u32 %s40, 1
        %s128 = scalar_lea.sflag [#allocation3], %s127
        %s129 = sand.u32 %s40, 1
        %s130 = smul.addr %s129, 2
        %s131 = scalar_lea.vmem [#allocation2], %s130
        // Predicated region
        $region25: #{tpu_custom_call.1} parent=23 // pred_check
          %p132 = pneg %p53
        $region26: #{tpu_custom_call.1} parent=23 // pred_check_branch
          %134 = sbr.rel (%p132) target = $region28
        $region27: #{tpu_custom_call.1} parent=23 // pred_region
          %135 = dma.done %s128, 32
        $region28: #{tpu_custom_call.1} parent=23 // pred_fallthru
          _
        %s136 = sand.u32 %s40, 1
        %s137 = scalar_lea.sflag [#allocation3], %s136
        %s138 = sand.u32 %s40, 1
        %s139 = smul.addr %s138, 2
        %s140 = scalar_lea.vmem [#allocation2], %s139
        %p141 = pneg %p53
        %p142 = pneg %p50
        %p143 = pneg %p81
        %p144 = pneg %p78
        %s145 = sand.u32 %s68, 1
        %s146 = scalar_lea.sflag [#allocation4], %s145
        %s147 = sand.u32 %s68, 1
        %s148 = smul.addr %s147, 2
        %s149 = scalar_lea.vmem [#allocation5], %s148
        %v150 = vld [vmem:[%s131] sm:$0x3]
        %v151 = vtanh.pop %v150
        %s152 = smul.u32 %s23, 128
        %v153 = vlaneseq
        %v154 = vand.u32 %v153, 127
        %v155 = vstv %s152
        %v156 = vadd.s32 %v155, %v154
        %vm157 = vcmp.lt.s32.totalorder %v156, 512
        %v158 = vsel %vm157, %v151, %v150
        %159 = vst [vmem:[%s149] sm:$0x3] %v158
        %s160 = sand.u32 %s68, 1
        %s161 = scalar_lea.sflag [#allocation4], %s160
        %s162 = sand.u32 %s68, 1
        %s163 = smul.addr %s162, 2
        %s164 = scalar_lea.vmem [#allocation5], %s163
        // Predicated region
        $region29: #{tpu_custom_call.1} parent=23 // pred_check
          %p165 = pneg %p78
        $region30: #{tpu_custom_call.1} parent=23 // pred_check_branch
          %167 = sbr.rel (%p165) target = $region32
        $region31: #{tpu_custom_call.1} parent=23 // pred_region
          %s169 = ssub.s32 32, 32
          %170 = vsyncadd %s161, %s169
          %s171 = smul.addr %s22, 8
          %s172 = sadd.s32 %s23, %s171
          %s173 = smul.addr %s172, 32
          %s174 = scalar_lea.hbm %s1, %s173
          %s176 = sshll.u32 %s164, 4
          %s177 = int_to_ptr.vmem [resolvable:$true] %s176
          %179 = dma.vmem_to_hbm [thread:$0]  %s177, 32, %s174, %s161
        $region32: #{tpu_custom_call.1} parent=23 // pred_fallthru
          _
      $region24: #{tpu_custom_call.1} parent=5 // pred_fallthru
        _
      %p180 = scmp.le.s32.totalorder 2, %s13
      // Predicated region
      $region33: #{tpu_custom_call.1} parent=5 // pred_check
        %p181 = pneg %p180
      $region34: #{tpu_custom_call.1} parent=5 // pred_check_branch
        %183 = sbr.rel (%p181) target = $region36
      $region35: #{tpu_custom_call.1} parent=5 // pred_region
        %s184 = ssub.s32 %s13, 2
        // Predicated region
        $region37: #{tpu_custom_call.1} parent=35 // pred_check
          %p185 = pneg %p84
        $region38: #{tpu_custom_call.1} parent=35 // pred_check_branch
          %187 = sbr.rel (%p185) target = $region40
        $region39: #{tpu_custom_call.1} parent=35 // pred_region
          %s188 = sand.u32 %s69, 1
          %s189 = scalar_lea.sflag [#allocation4], %s188
          %s190 = sand.u32 %s69, 1
          %s191 = smul.addr %s190, 2
          %s192 = scalar_lea.vmem [#allocation5], %s191
          %193 = dma.done %s189, 32
        $region40: #{tpu_custom_call.1} parent=35 // pred_fallthru
          _
      $region36: #{tpu_custom_call.1} parent=5 // pred_fallthru
        _
    $region6: #{tpu_custom_call.1} parent=1 // loop_footer
      %s17 = sadd.s32 1, %s13
    $region7: #{tpu_custom_call.1} parent=1 // loop_footer_branch
      %12 = sbr.rel target = $region3
    $region8: #{tpu_custom_call.1} parent=1 // loop_exit
      _
    %194 = vsyncpa [#allocation3], 1
    %s195 = scalar_lea.sflag [#allocation3], 1
    %196 = vsyncpa %s195, 1
    %197 = vsyncpa [#allocation4], 1
    %s198 = scalar_lea.sflag [#allocation4], 1
    %199 = vsyncpa %s198, 1

</llo_original>
